<compile_context>
chip_gen: v7x
topology: tpu7x:2x2x1
jax: 0.10.0
libtpu: 0.0.40
codegen_flags: <defaults>
</compile_context>

<pallas_src>
import jax
import jax.numpy as jnp
from jax import lax
from jax.experimental import pallas as pl
from jax.experimental.pallas import tpu as pltpu


def _make_ssa_kernel(nb, A, C):
    """Kernel body processing `nb` batch elements (nb*A rows) per grid step."""

    def kernel(x_ref, wt_ref, b_ref, o_ref):
        bf16 = jnp.bfloat16
        f32 = jnp.float32

        x = x_ref[...].astype(bf16)      # (nb*A, C)  rows already in output order
        wt = wt_ref[...].astype(bf16)    # (Cin, Cout)
        bias = b_ref[...]                # (1, Cout) f32

        # Shared 1x1 conv #1, batched over all nb*A rows: q == k == v.
        q = jnp.dot(x, wt, preferred_element_type=f32) + bias       # (nb*A, C) f32
        q_bf = q.astype(bf16)

        # Per-batch channel self-similarity attention + shared 1x1 conv #2.
        for b in range(nb):
            q_b = q_bf[b * A:(b + 1) * A, :]                        # (A, C)
            # s[i, j] = sum_a q[a, i] * q[a, j]   (symmetric C x C gram)
            s = lax.dot_general(q_b, q_b, (((0,), (0,)), ((), ())),
                                preferred_element_type=f32)
            # softmax along axis 0 of the symmetric s  ==  softmax(s, -1)^T
            m = jnp.max(s, axis=0, keepdims=True)
            e = jnp.exp(s - m)
            denom = jnp.sum(e, axis=0, keepdims=True)
            p_t = (e * pl.reciprocal(denom, approx=True)).astype(bf16)   # (C, C) == p^T
            # qkv[a, i] = sum_j q[a, j] * p[i, j]  ->  q @ p^T (canonical contraction)
            qkv_b = jnp.dot(q_b, p_t, preferred_element_type=f32).astype(bf16)
            # Shared 1x1 conv #2, fused per batch element, written straight out.
            out_b = jnp.dot(qkv_b, wt, preferred_element_type=f32) + bias
            o_ref[b * A:(b + 1) * A, :] = out_b.astype(o_ref.dtype)

    return kernel


def _batches_per_step(B, A):
    # v7x has 2 TensorCores: one batch element per "parallel" grid step so the
    # grid shards across cores.  v5e/v6e are single-TC: fold the whole batch into
    # one invocation (removes per-step overhead on this latency-bound kernel).
    try:
        kind = jax.devices()[0].device_kind.lower()
    except Exception:
        kind = ""
    if B > 1 and A % 8 == 0 and "v7" in kind:
        return 1
    return B


def _ssa_pallas_impl(inputs_bhwc, conv_w, conv_b):
    """inputs_bhwc: (B, H, W, C) f32 (what the torch module receives).
    conv_w: (Cout, Cin, 1, 1), conv_b: (Cout,), with Cout == Cin == C.
    Returns (B, W, H, C), matching the torch module's output."""
    B, H, W, C = inputs_bhwc.shape
    A = H * W

    # Fold torch's trailing permute(0, 3, 2, 1) into an input-side row reorder:
    # the whole pipeline (pointwise convs + spatial-sum gram) is equivariant to
    # the spatial row ordering, so row (b, w*H + h) of the kernel output is
    # exactly out[b, w, h, :] and the final reshape is a free contiguous view.
    x_perm = jnp.transpose(inputs_bhwc, (0, 2, 1, 3)).reshape(B * A, C)
    wt = jnp.transpose(conv_w[:, :, 0, 0])       # (Cin, Cout)
    bias = conv_b.reshape(1, C)

    nb = _batches_per_step(B, A)

    out_flat = pl.pallas_call(
        _make_ssa_kernel(nb, A, C),
        out_shape=jax.ShapeDtypeStruct((B * A, C), inputs_bhwc.dtype),
        grid_spec=pltpu.PrefetchScalarGridSpec(
            num_scalar_prefetch=0,
            grid=(B // nb,),
            in_specs=[
                pl.BlockSpec((nb * A, C), lambda g: (g, 0)),
                pl.BlockSpec((C, C), lambda g: (0, 0)),
                pl.BlockSpec((1, C), lambda g: (0, 0)),
            ],
            out_specs=pl.BlockSpec((nb * A, C), lambda g: (g, 0)),
        ),
        compiler_params=pltpu.CompilerParams(
            dimension_semantics=("parallel",),
        ),
    )(x_perm, wt, bias)

    # Rows are already in (b, w*H + h) order -> free contiguous reshape.
    return out_flat.reshape(B, W, H, C)


ssa_pallas = jax.jit(_ssa_pallas_impl)


def ssa_reference(inputs_bhwc, conv_w, conv_b):
    """Pure-JAX, high-precision re-implementation of the torch forward."""
    hi = jax.lax.Precision.HIGHEST
    B, H, W, C = inputs_bhwc.shape
    wm = conv_w[:, :, 0, 0]                                        # (Co, Ci)
    x = jnp.transpose(inputs_bhwc, (0, 3, 1, 2))                   # (B, C, H, W)
    q = jnp.einsum('oc,bchw->bohw', wm, x, precision=hi) + conv_b[None, :, None, None]
    a = H * W
    qf = q.reshape(B, C, a)
    qk = jnp.einsum('bca,bda->bcd', qf, qf, precision=hi)
    qk = jax.nn.softmax(qk, axis=-1)
    qkv = jnp.einsum('bcd,bda->bca', qk, qf, precision=hi).reshape(B, C, H, W)
    out = jnp.einsum('oc,bchw->bohw', wm, qkv, precision=hi) + conv_b[None, :, None, None]
    return jnp.transpose(out, (0, 3, 2, 1))


if __name__ == "__main__":
    # in_channels == out_channels == C (the shared conv is applied twice) and C
    # must equal the input's last dim, as the torch module implies.
    B, H, W, C = 2, 8, 8, 128
    key = jax.random.PRNGKey(0)
    k_x, k_w, k_b = jax.random.split(key, 3)

    x = jax.random.normal(k_x, (B, H, W, C), dtype=jnp.float32)
    # Weight scale chosen so the channel-similarity softmax is non-degenerate.
    conv_w = 0.3 * jax.random.normal(k_w, (C, C, 1, 1), dtype=jnp.float32) / jnp.sqrt(
        jnp.float32(C))
    conv_b = 0.1 * jax.random.normal(k_b, (C,), dtype=jnp.float32)

    out = jax.block_until_ready(ssa_pallas(x, conv_w, conv_b))

    ref = ssa_reference(x, conv_w, conv_b)
    assert out.shape == (B, W, H, C), out.shape
    max_err = float(jnp.max(jnp.abs(out - ref)))
    scale = float(jnp.max(jnp.abs(ref)))
    # Single-pass bf16 MXU matmuls with f32 accumulation -> ~1% of output scale.
    assert max_err <= 5e-2 * scale, (max_err, scale)
    print("KERNEL_OK")
</pallas_src>

<mosaic_0001>
module attributes {stable_mosaic.version = 11 : i64} {
  func.func @kernel(%arg0: i32, %arg1: memref<128x128xf32, #tpu.memory_space<vmem>>, %arg2: memref<128x128xf32, #tpu.memory_space<vmem>>, %arg3: memref<1x128xf32, #tpu.memory_space<vmem>>, %arg4: memref<128x128xf32, #tpu.memory_space<vmem>>) attributes {dimension_semantics = [#tpu.dimension_semantics<parallel>], iteration_bounds = array<i64: 1>, scalar_prefetch = 0 : i64, scratch_operands = 0 : i64, tpu.core_type = #tpu.core_type<tc>, window_params = [{transform_indices = @transform_0, window_bounds = array<i64: 128, 128>}, {pipeline_mode = #tpu.pipeline_mode<synchronous>, transform_indices = @transform_1, window_bounds = array<i64: 128, 128>}, {pipeline_mode = #tpu.pipeline_mode<synchronous>, transform_indices = @transform_2, window_bounds = array<i64: 1, 128>}, {transform_indices = @transform_3, window_bounds = array<i64: 128, 128>}]} {
    %c0 = arith.constant 0 : index
    %c0_0 = arith.constant 0 : index
    %0 = vector.load %arg1[%c0, %c0_0] : memref<128x128xf32, #tpu.memory_space<vmem>>, vector<128x128xf32>
    %1 = arith.truncf %0 : vector<128x128xf32> to vector<128x128xbf16>
    %c0_1 = arith.constant 0 : index
    %c0_2 = arith.constant 0 : index
    %2 = vector.load %arg2[%c0_1, %c0_2] : memref<128x128xf32, #tpu.memory_space<vmem>>, vector<128x128xf32>
    %3 = arith.truncf %2 : vector<128x128xf32> to vector<128x128xbf16>
    %c0_3 = arith.constant 0 : index
    %c0_4 = arith.constant 0 : index
    %4 = vector.load %arg3[%c0_3, %c0_4] : memref<1x128xf32, #tpu.memory_space<vmem>>, vector<1x128xf32>
    %cst = arith.constant dense<0.000000e+00> : vector<128x128xf32>
    %5 = tpu.matmul %1, %3, %cst {dimension_numbers = #tpu.dot_dimension_numbers<[1], [0], [0], [1], [0, 0, 1, 1], [], []>} : vector<128x128xbf16>, vector<128x128xbf16>, vector<128x128xf32> -> vector<128x128xf32>
    %6 = vector.broadcast %4 : vector<1x128xf32> to vector<128x128xf32>
    %7 = arith.addf %5, %6 : vector<128x128xf32>
    %8 = arith.truncf %7 : vector<128x128xf32> to vector<128x128xbf16>
    %9 = vector.extract_strided_slice %8 {offsets = [0, 0], sizes = [64, 128], strides = [1, 1]} : vector<128x128xbf16> to vector<64x128xbf16>
    %cst_5 = arith.constant dense<0.000000e+00> : vector<128x128xf32>
    %10 = tpu.matmul %9, %9, %cst_5 {dimension_numbers = #tpu.dot_dimension_numbers<[0], [0], [1], [1], [0, 1, 1, 1], [], []>} : vector<64x128xbf16>, vector<64x128xbf16>, vector<128x128xf32> -> vector<128x128xf32>
    %cst_6 = arith.constant dense<0xFF800000> : vector<128xf32>
    %11 = vector.multi_reduction <maximumf>, %10, %cst_6 [0] : vector<128x128xf32> to vector<128xf32>
    %12 = vector.shape_cast %11 : vector<128xf32> to vector<1x128xf32>
    %13 = vector.broadcast %12 : vector<1x128xf32> to vector<128x128xf32>
    %14 = arith.subf %10, %13 : vector<128x128xf32>
    %15 = math.exp %14 : vector<128x128xf32>
    %cst_7 = arith.constant dense<0.000000e+00> : vector<128xf32>
    %16 = vector.multi_reduction <add>, %15, %cst_7 [0] : vector<128x128xf32> to vector<128xf32>
    %17 = vector.shape_cast %16 : vector<128xf32> to vector<1x128xf32>
    %18 = tpu.reciprocal %17 {approx = true} : vector<1x128xf32> -> vector<1x128xf32>
    %19 = vector.broadcast %18 : vector<1x128xf32> to vector<128x128xf32>
    %20 = arith.mulf %15, %19 : vector<128x128xf32>
    %21 = arith.truncf %20 : vector<128x128xf32> to vector<128x128xbf16>
    %cst_8 = arith.constant dense<0.000000e+00> : vector<64x128xf32>
    %22 = tpu.matmul %9, %21, %cst_8 {dimension_numbers = #tpu.dot_dimension_numbers<[1], [0], [0], [1], [0, 0, 1, 1], [], []>} : vector<64x128xbf16>, vector<128x128xbf16>, vector<64x128xf32> -> vector<64x128xf32>
    %23 = arith.truncf %22 : vector<64x128xf32> to vector<64x128xbf16>
    %cst_9 = arith.constant dense<0.000000e+00> : vector<64x128xf32>
    %24 = tpu.matmul %23, %3, %cst_9 {dimension_numbers = #tpu.dot_dimension_numbers<[1], [0], [0], [1], [0, 0, 1, 1], [], []>} : vector<64x128xbf16>, vector<128x128xbf16>, vector<64x128xf32> -> vector<64x128xf32>
    %25 = vector.broadcast %4 : vector<1x128xf32> to vector<64x128xf32>
    %26 = arith.addf %24, %25 : vector<64x128xf32>
    %c0_10 = arith.constant 0 : index
    %c0_11 = arith.constant 0 : index
    %27 = vector.load %arg4[%c0_10, %c0_11] : memref<128x128xf32, #tpu.memory_space<vmem>>, vector<64x128xf32>
    tpu.vector_store %arg4[%c0_10, %c0_11], %26 {strides = array<i32>} : memref<128x128xf32, #tpu.memory_space<vmem>>, vector<64x128xf32>,
    %28 = vector.extract_strided_slice %8 {offsets = [64, 0], sizes = [64, 128], strides = [1, 1]} : vector<128x128xbf16> to vector<64x128xbf16>
    %cst_12 = arith.constant dense<0.000000e+00> : vector<128x128xf32>
    %29 = tpu.matmul %28, %28, %cst_12 {dimension_numbers = #tpu.dot_dimension_numbers<[0], [0], [1], [1], [0, 1, 1, 1], [], []>} : vector<64x128xbf16>, vector<64x128xbf16>, vector<128x128xf32> -> vector<128x128xf32>
    %cst_13 = arith.constant dense<0xFF800000> : vector<128xf32>
    %30 = vector.multi_reduction <maximumf>, %29, %cst_13 [0] : vector<128x128xf32> to vector<128xf32>
    %31 = vector.shape_cast %30 : vector<128xf32> to vector<1x128xf32>
    %32 = vector.broadcast %31 : vector<1x128xf32> to vector<128x128xf32>
    %33 = arith.subf %29, %32 : vector<128x128xf32>
    %34 = math.exp %33 : vector<128x128xf32>
    %cst_14 = arith.constant dense<0.000000e+00> : vector<128xf32>
    %35 = vector.multi_reduction <add>, %34, %cst_14 [0] : vector<128x128xf32> to vector<128xf32>
    %36 = vector.shape_cast %35 : vector<128xf32> to vector<1x128xf32>
    %37 = tpu.reciprocal %36 {approx = true} : vector<1x128xf32> -> vector<1x128xf32>
    %38 = vector.broadcast %37 : vector<1x128xf32> to vector<128x128xf32>
    %39 = arith.mulf %34, %38 : vector<128x128xf32>
    %40 = arith.truncf %39 : vector<128x128xf32> to vector<128x128xbf16>
    %cst_15 = arith.constant dense<0.000000e+00> : vector<64x128xf32>
    %41 = tpu.matmul %28, %40, %cst_15 {dimension_numbers = #tpu.dot_dimension_numbers<[1], [0], [0], [1], [0, 0, 1, 1], [], []>} : vector<64x128xbf16>, vector<128x128xbf16>, vector<64x128xf32> -> vector<64x128xf32>
    %42 = arith.truncf %41 : vector<64x128xf32> to vector<64x128xbf16>
    %cst_16 = arith.constant dense<0.000000e+00> : vector<64x128xf32>
    %43 = tpu.matmul %42, %3, %cst_16 {dimension_numbers = #tpu.dot_dimension_numbers<[1], [0], [0], [1], [0, 0, 1, 1], [], []>} : vector<64x128xbf16>, vector<128x128xbf16>, vector<64x128xf32> -> vector<64x128xf32>
    %44 = vector.broadcast %4 : vector<1x128xf32> to vector<64x128xf32>
    %45 = arith.addf %43, %44 : vector<64x128xf32>
    %c64 = arith.constant 64 : index
    %c0_17 = arith.constant 0 : index
    %46 = vector.load %arg4[%c64, %c0_17] : memref<128x128xf32, #tpu.memory_space<vmem>>, vector<64x128xf32>
    tpu.vector_store %arg4[%c64, %c0_17], %45 {strides = array<i32>} : memref<128x128xf32, #tpu.memory_space<vmem>>, vector<64x128xf32>,
    return
  }
  func.func @transform_0(%arg0: i32) -> (i32, i32) {
    %c0_i32 = arith.constant 0 : i32
    %c0_i32_0 = arith.constant 0 : i32
    return %arg0, %c0_i32 : i32, i32
  }
  func.func @transform_1(%arg0: i32) -> (i32, i32) {
    %c0_i32 = arith.constant 0 : i32
    %c0_i32_0 = arith.constant 0 : i32
    %c0_i32_1 = arith.constant 0 : i32
    return %c0_i32, %c0_i32_0 : i32, i32
  }
  func.func @transform_2(%arg0: i32) -> (i32, i32) {
    %c0_i32 = arith.constant 0 : i32
    %c0_i32_0 = arith.constant 0 : i32
    %c0_i32_1 = arith.constant 0 : i32
    return %c0_i32, %c0_i32_0 : i32, i32
  }
  func.func @transform_3(%arg0: i32) -> (i32, i32) {
    %c0_i32 = arith.constant 0 : i32
    %c0_i32_0 = arith.constant 0 : i32
    return %arg0, %c0_i32 : i32, i32
  }
}

</mosaic_0001>

<llo_original>
// kernel: _ssa_pallas_impl.1
$region0: #{_ssa_pallas_impl.1}
  #allocation0 [shape = 'u32[]', space=smem, size = 0x4, offset = 0x4, fixed_abs, tag = 'smem constant byte address 0x4 - core index']
  #allocation1 [shape = 'u32[144,128]{1,0:T(1,128)}', space=vmem, size = 0x12000, scoped, tag = 'internal scratch']
  %s0 = inlined_call_operand.vmem [shape: f32[128,128], index: 0, kind: input, shape index: {}]
  %s1 = inlined_call_operand.vmem [shape: f32[128,128], index: 1, kind: input, shape index: {}]
  %s2 = inlined_call_operand.vmem [shape: f32[1,128], index: 2, kind: input, shape index: {}]
  %s3 = inlined_call_operand.hbm [shape: f32[128,128], index: 3, kind: output, shape index: {}]
  %s4 = sld [smem:[#allocation0]]
  $region22: #{_ssa_pallas_impl.1} parent=0
    _
  %s6 = ssub.s32 1, %s4
  %s7 = scalar_select 0, %s6, %s4
  $region1: #{_ssa_pallas_impl.1} parent=0
    #allocation2 [shape = 'u8[65536]{0}', space=vmem, size = 0x10000, scoped, tag = 'output window, operand 0, single buffered']
    #allocation3 [shape = 's32[1]{0}', space=sflag, size = 0x4, scoped, tag = 'scoped memory for _ssa_pallas_impl.1']
    %8 = vsyncpa [#allocation3], 0
    // Predicated region
    $region2: #{_ssa_pallas_impl.1} parent=1 // pred_check
      _
    $region3: #{_ssa_pallas_impl.1} parent=1 // pred_check_branch
      %10 = sbr.rel (0) target = $region5
    $region4: #{_ssa_pallas_impl.1} parent=1 // pred_region
      _
    $region5: #{_ssa_pallas_impl.1} parent=1 // pred_fallthru
      _
    // Predicated region
    $region6: #{_ssa_pallas_impl.1} parent=1 // pred_check
      _
    $region7: #{_ssa_pallas_impl.1} parent=1 // pred_check_branch
      %12 = sbr.rel (0) target = $region9
    $region8: #{_ssa_pallas_impl.1} parent=1 // pred_region
      _
    $region9: #{_ssa_pallas_impl.1} parent=1 // pred_fallthru
      _
    // Predicated region
    $region10: #{_ssa_pallas_impl.1} parent=1 // pred_check
      _
    $region11: #{_ssa_pallas_impl.1} parent=1 // pred_check_branch
      %14 = sbr.rel (0) target = $region13
    $region12: #{_ssa_pallas_impl.1} parent=1 // pred_region
      _
    $region13: #{_ssa_pallas_impl.1} parent=1 // pred_fallthru
      _
    %v16 = vld [vmem:[%s0] sm:$0xff]
    %v17 = vld [vmem:[%s0 + $0x8] sm:$0xff]
    %v18 = vld [vmem:[%s0 + $0x10] sm:$0xff]
    %v19 = vld [vmem:[%s0 + $0x18] sm:$0xff]
    %v20 = vld [vmem:[%s0 + $0x20] sm:$0xff]
    %v21 = vld [vmem:[%s0 + $0x28] sm:$0xff]
    %v22 = vld [vmem:[%s0 + $0x30] sm:$0xff]
    %v23 = vld [vmem:[%s0 + $0x38] sm:$0xff]
    %v24 = vld [vmem:[%s0 + $0x40] sm:$0xff]
    %v25 = vld [vmem:[%s0 + $0x48] sm:$0xff]
    %v26 = vld [vmem:[%s0 + $0x50] sm:$0xff]
    %v27 = vld [vmem:[%s0 + $0x58] sm:$0xff]
    %v28 = vld [vmem:[%s0 + $0x60] sm:$0xff]
    %v29 = vld [vmem:[%s0 + $0x68] sm:$0xff]
    %v30 = vld [vmem:[%s0 + $0x70] sm:$0xff]
    %v31 = vld [vmem:[%s0 + $0x78] sm:$0xff]
    %v32 = vpack.c.bf16 %v17, %v16
    %v33 = vpack.c.bf16 %v19, %v18
    %v34 = vpack.c.bf16 %v21, %v20
    %v35 = vpack.c.bf16 %v23, %v22
    %v36 = vpack.c.bf16 %v25, %v24
    %v37 = vpack.c.bf16 %v27, %v26
    %v38 = vpack.c.bf16 %v29, %v28
    %v39 = vpack.c.bf16 %v31, %v30
    %v40 = vld [vmem:[%s1] sm:$0xff]
    %v41 = vld [vmem:[%s1 + $0x8] sm:$0xff]
    %v42 = vld [vmem:[%s1 + $0x10] sm:$0xff]
    %v43 = vld [vmem:[%s1 + $0x18] sm:$0xff]
    %v44 = vld [vmem:[%s1 + $0x20] sm:$0xff]
    %v45 = vld [vmem:[%s1 + $0x28] sm:$0xff]
    %v46 = vld [vmem:[%s1 + $0x30] sm:$0xff]
    %v47 = vld [vmem:[%s1 + $0x38] sm:$0xff]
    %v48 = vld [vmem:[%s1 + $0x40] sm:$0xff]
    %v49 = vld [vmem:[%s1 + $0x48] sm:$0xff]
    %v50 = vld [vmem:[%s1 + $0x50] sm:$0xff]
    %v51 = vld [vmem:[%s1 + $0x58] sm:$0xff]
    %v52 = vld [vmem:[%s1 + $0x60] sm:$0xff]
    %v53 = vld [vmem:[%s1 + $0x68] sm:$0xff]
    %v54 = vld [vmem:[%s1 + $0x70] sm:$0xff]
    %v55 = vld [vmem:[%s1 + $0x78] sm:$0xff]
    %v56 = vpack.c.bf16 %v41, %v40
    %v57 = vpack.c.bf16 %v43, %v42
    %v58 = vpack.c.bf16 %v45, %v44
    %v59 = vpack.c.bf16 %v47, %v46
    %v60 = vpack.c.bf16 %v49, %v48
    %v61 = vpack.c.bf16 %v51, %v50
    %v62 = vpack.c.bf16 %v53, %v52
    %v63 = vpack.c.bf16 %v55, %v54
    %v64 = vld [vmem:[%s2] sm:$0x1]
    %v66 = vlaneseq
    %v67 = vshrl.u32 %v66, 7
    %v68 = vsub.s32 0, %v67
    %v69 = vrot.slane %v64, %v68
    %71 = vmatprep.subr.bf16.mxu0 0
    %72 = vmatpush1.bf16.msra.mxu0 %v56
    %73 = vmatprep.subr.bf16.mxu0 0
    %74 = vmatpush1.bf16.msra.mxu0 %v57
    %75 = vmatprep.subr.bf16.mxu0 0
    %76 = vmatpush1.bf16.msra.mxu0 %v58
    %77 = vmatprep.subr.bf16.mxu0 0
    %78 = vmatpush1.bf16.msra.mxu0 %v59
    %79 = vmatprep.subr.bf16.mxu0 0
    %80 = vmatpush1.bf16.msra.mxu0 %v60
    %81 = vmatprep.subr.bf16.mxu0 0
    %82 = vmatpush1.bf16.msra.mxu0 %v61
    %83 = vmatprep.subr.bf16.mxu0 0
    %84 = vmatpush1.bf16.msra.mxu0 %v62
    %85 = vmatprep.subr.bf16.mxu0 0
    %86 = vmatpush1.bf16.msra.mxu0 %v63
    %87 = vmatprep.subr.bf16.mxu0 0
    %88 = vmatpush1.bf16.msra.mxu0 0
    %89 = vmatprep.subr.bf16.mxu0 0
    %90 = vmatpush1.bf16.msra.mxu0 0
    %91 = vmatprep.subr.bf16.mxu0 0
    %92 = vmatpush1.bf16.msra.mxu0 0
    %93 = vmatprep.subr.bf16.mxu0 0
    %94 = vmatpush1.bf16.msra.mxu0 0
    %95 = vmatprep.subr.bf16.mxu0 0
    %96 = vmatpush1.bf16.msra.mxu0 0
    %97 = vmatprep.subr.bf16.mxu0 0
    %98 = vmatpush1.bf16.msra.mxu0 0
    %99 = vmatprep.subr.bf16.mxu0 0
    %100 = vmatpush1.bf16.msra.mxu0 0
    %101 = vmatprep.subr.bf16.mxu0 0
    %102 = vmatpush1.bf16.msra.mxu0 0
    %103 = vmatprep.mubr.bf16.mxu0 0
    %104 = vmatmul.mubr.bf16.gmra.mrb[0].mxu0 %v32
    %v105 = vpop.f32.mrb[0].mxu0
    %v106 = vadd.f32 %v69, %v105
    %v107 = vpop.f32.mrb[0].mxu0
    %v108 = vpop.f32.mrb[0].mxu0
    %v109 = vadd.f32 %v69, %v108
    %v110 = vpop.f32.mrb[0].mxu0
    %111 = vmatprep.mubr.bf16.mxu0 0
    %112 = vmatmul.mubr.bf16.gmra.mrb[0].mxu0 %v33
    %v113 = vpop.f32.mrb[0].mxu0
    %v114 = vadd.f32 %v69, %v113
    %v115 = vpop.f32.mrb[0].mxu0
    %v116 = vpop.f32.mrb[0].mxu0
    %v117 = vadd.f32 %v69, %v116
    %v118 = vpop.f32.mrb[0].mxu0
    %119 = vmatprep.mubr.bf16.mxu0 0
    %120 = vmatmul.mubr.bf16.gmra.mrb[0].mxu0 %v34
    %v121 = vpop.f32.mrb[0].mxu0
    %v122 = vadd.f32 %v69, %v121
    %v123 = vpop.f32.mrb[0].mxu0
    %v124 = vpop.f32.mrb[0].mxu0
    %v125 = vadd.f32 %v69, %v124
    %v126 = vpop.f32.mrb[0].mxu0
    %127 = vmatprep.mubr.bf16.mxu0 0
    %128 = vmatmul.mubr.bf16.gmra.mrb[0].mxu0 %v35
    %v129 = vpop.f32.mrb[0].mxu0
    %v130 = vadd.f32 %v69, %v129
    %v131 = vpop.f32.mrb[0].mxu0
    %v132 = vpop.f32.mrb[0].mxu0
    %v133 = vadd.f32 %v69, %v132
    %v134 = vpop.f32.mrb[0].mxu0
    %135 = vmatprep.mubr.bf16.mxu0 0
    %136 = vmatmul.mubr.bf16.gmra.mrb[0].mxu0 %v36
    %v137 = vpop.f32.mrb[0].mxu0
    %v138 = vadd.f32 %v69, %v137
    %v139 = vpop.f32.mrb[0].mxu0
    %v140 = vpop.f32.mrb[0].mxu0
    %v141 = vadd.f32 %v69, %v140
    %v142 = vpop.f32.mrb[0].mxu0
    %143 = vmatprep.mubr.bf16.mxu0 0
    %144 = vmatmul.mubr.bf16.gmra.mrb[0].mxu0 %v37
    %v145 = vpop.f32.mrb[0].mxu0
    %v146 = vadd.f32 %v69, %v145
    %v147 = vpop.f32.mrb[0].mxu0
    %v148 = vpop.f32.mrb[0].mxu0
    %v149 = vadd.f32 %v69, %v148
    %v150 = vpop.f32.mrb[0].mxu0
    %151 = vmatprep.mubr.bf16.mxu0 0
    %152 = vmatmul.mubr.bf16.gmra.mrb[0].mxu0 %v38
    %v153 = vpop.f32.mrb[0].mxu0
    %v154 = vadd.f32 %v69, %v153
    %v155 = vpop.f32.mrb[0].mxu0
    %v156 = vpop.f32.mrb[0].mxu0
    %v157 = vadd.f32 %v69, %v156
    %v158 = vpop.f32.mrb[0].mxu0
    %159 = vmatprep.mubr.bf16.mxu0 0
    %160 = vmatmul.mubr.bf16.gmra.mrb[0].mxu0 %v39
    %v161 = vpop.f32.mrb[0].mxu0
    %v162 = vadd.f32 %v69, %v161
    %v163 = vpop.f32.mrb[0].mxu0
    %v164 = vpop.f32.mrb[0].mxu0
    %v165 = vadd.f32 %v69, %v164
    %v166 = vpop.f32.mrb[0].mxu0
    %167 = vdwg.mxu0
    %v168 = vpack.c.bf16 %v109, %v106
    %v169 = vpack.c.bf16 %v117, %v114
    %v170 = vpack.c.bf16 %v125, %v122
    %v171 = vpack.c.bf16 %v133, %v130
    %v172 = vpack.c.bf16 %v141, %v138
    %v173 = vpack.c.bf16 %v149, %v146
    %v174 = vpack.c.bf16 %v157, %v154
    %v175 = vpack.c.bf16 %v165, %v162
    %176 = vxpose.xlu0.c.b16.start [1/8] %v168, 128
    %177 = vxpose.xlu0.c.b16.cont [2/8] %v169, 128
    %178 = vxpose.xlu0.c.b16.cont [3/8] %v170, 128
    %179 = vxpose.xlu0.c.b16.cont [4/8] %v171, 128
    %180 = vxpose.xlu0.c.b16.cont [5/8] 0, 128
    %181 = vxpose.xlu0.c.b16.cont [6/8] 0, 128
    %182 = vxpose.xlu0.c.b16.cont [7/8] 0, 128
    %183 = vxpose.xlu0.c.b16.end [8/8] 0, 128
    %v184 = vpop.trf.xlu0
    %v185 = vpop.trf.xlu0
    %v186 = vpop.trf.xlu0
    %v187 = vpop.trf.xlu0
    %v188 = vpop.trf.xlu0
    %v189 = vpop.trf.xlu0
    %v190 = vpop.trf.xlu0
    %v191 = vpop.trf.xlu0
    %vm192 = vcmask 523264
    %v194 = vsel %vm192, %v184, 0
    %v197 = vsel %vm192, %v185, 0
    %v200 = vsel %vm192, %v186, 0
    %v203 = vsel %vm192, %v187, 0
    %v206 = vsel %vm192, %v188, 0
    %v209 = vsel %vm192, %v189, 0
    %v212 = vsel %vm192, %v190, 0
    %v215 = vsel %vm192, %v191, 0
    %217 = vmatprep.subr.bf16.mxu0 0
    %218 = vmatpush1.bf16.msra.mxu0 %v168
    %219 = vmatprep.subr.bf16.mxu0 0
    %220 = vmatpush1.bf16.msra.mxu0 %v169
    %221 = vmatprep.subr.bf16.mxu0 0
    %222 = vmatpush1.bf16.msra.mxu0 %v170
    %223 = vmatprep.subr.bf16.mxu0 0
    %224 = vmatpush1.bf16.msra.mxu0 %v171
    %225 = vmatprep.subr.bf16.mxu0 0
    %226 = vmatpush1.bf16.msra.mxu0 0
    %227 = vmatprep.subr.bf16.mxu0 0
    %228 = vmatpush1.bf16.msra.mxu0 0
    %229 = vmatprep.subr.bf16.mxu0 0
    %230 = vmatpush1.bf16.msra.mxu0 0
    %231 = vmatprep.subr.bf16.mxu0 0
    %232 = vmatpush1.bf16.msra.mxu0 0
    %233 = vmatprep.subr.bf16.mxu0 0
    %234 = vmatpush1.bf16.msra.mxu0 0
    %235 = vmatprep.subr.bf16.mxu0 0
    %236 = vmatpush1.bf16.msra.mxu0 0
    %237 = vmatprep.subr.bf16.mxu0 0
    %238 = vmatpush1.bf16.msra.mxu0 0
    %239 = vmatprep.subr.bf16.mxu0 0
    %240 = vmatpush1.bf16.msra.mxu0 0
    %241 = vmatprep.subr.bf16.mxu0 0
    %242 = vmatpush1.bf16.msra.mxu0 0
    %243 = vmatprep.subr.bf16.mxu0 0
    %244 = vmatpush1.bf16.msra.mxu0 0
    %245 = vmatprep.subr.bf16.mxu0 0
    %246 = vmatpush1.bf16.msra.mxu0 0
    %247 = vmatprep.subr.bf16.mxu0 0
    %248 = vmatpush1.bf16.msra.mxu0 0
    %249 = vmatprep.mubr.bf16.mxu0 0
    %250 = vmatmul.mubr.bf16.gmra.mrb[0].mxu0 %v194
    %v251 = vpop.f32.mrb[0].mxu0
    %v252 = vadd.f32 0.0, %v251
    %v253 = vpop.f32.mrb[0].mxu0
    %v254 = vpop.f32.mrb[0].mxu0
    %v255 = vadd.f32 0.0, %v254
    %v256 = vpop.f32.mrb[0].mxu0
    %257 = vmatprep.mubr.bf16.mxu0 0
    %258 = vmatmul.mubr.bf16.gmra.mrb[0].mxu0 %v197
    %v259 = vpop.f32.mrb[0].mxu0
    %v260 = vadd.f32 0.0, %v259
    %v261 = vpop.f32.mrb[0].mxu0
    %v262 = vpop.f32.mrb[0].mxu0
    %v263 = vadd.f32 0.0, %v262
    %v264 = vpop.f32.mrb[0].mxu0
    %265 = vmatprep.mubr.bf16.mxu0 0
    %266 = vmatmul.mubr.bf16.gmra.mrb[0].mxu0 %v200
    %v267 = vpop.f32.mrb[0].mxu0
    %v268 = vadd.f32 0.0, %v267
    %v269 = vpop.f32.mrb[0].mxu0
    %v270 = vpop.f32.mrb[0].mxu0
    %v271 = vadd.f32 0.0, %v270
    %v272 = vpop.f32.mrb[0].mxu0
    %273 = vmatprep.mubr.bf16.mxu0 0
    %274 = vmatmul.mubr.bf16.gmra.mrb[0].mxu0 %v203
    %v275 = vpop.f32.mrb[0].mxu0
    %v276 = vadd.f32 0.0, %v275
    %v277 = vpop.f32.mrb[0].mxu0
    %v278 = vpop.f32.mrb[0].mxu0
    %v279 = vadd.f32 0.0, %v278
    %v280 = vpop.f32.mrb[0].mxu0
    %281 = vmatprep.mubr.bf16.mxu0 0
    %282 = vmatmul.mubr.bf16.gmra.mrb[0].mxu0 %v206
    %v283 = vpop.f32.mrb[0].mxu0
    %v284 = vadd.f32 0.0, %v283
    %v285 = vpop.f32.mrb[0].mxu0
    %v286 = vpop.f32.mrb[0].mxu0
    %v287 = vadd.f32 0.0, %v286
    %v288 = vpop.f32.mrb[0].mxu0
    %289 = vmatprep.mubr.bf16.mxu0 0
    %290 = vmatmul.mubr.bf16.gmra.mrb[0].mxu0 %v209
    %v291 = vpop.f32.mrb[0].mxu0
    %v292 = vadd.f32 0.0, %v291
    %v293 = vpop.f32.mrb[0].mxu0
    %v294 = vpop.f32.mrb[0].mxu0
    %v295 = vadd.f32 0.0, %v294
    %v296 = vpop.f32.mrb[0].mxu0
    %297 = vmatprep.mubr.bf16.mxu0 0
    %298 = vmatmul.mubr.bf16.gmra.mrb[0].mxu0 %v212
    %v299 = vpop.f32.mrb[0].mxu0
    %v300 = vadd.f32 0.0, %v299
    %v301 = vpop.f32.mrb[0].mxu0
    %v302 = vpop.f32.mrb[0].mxu0
    %v303 = vadd.f32 0.0, %v302
    %v304 = vpop.f32.mrb[0].mxu0
    %305 = vmatprep.mubr.bf16.mxu0 0
    %306 = vmatmul.mubr.bf16.gmra.mrb[0].mxu0 %v215
    %v307 = vpop.f32.mrb[0].mxu0
    %v308 = vadd.f32 0.0, %v307
    %v309 = vpop.f32.mrb[0].mxu0
    %v310 = vpop.f32.mrb[0].mxu0
    %v311 = vadd.f32 0.0, %v310
    %v312 = vpop.f32.mrb[0].mxu0
    %313 = vdwg.mxu0
    %v314 = vmax.f32 %v252, %v268
    %v315 = vmax.f32 %v255, %v271
    %v316 = vmax.f32 %v260, %v276
    %v317 = vmax.f32 %v263, %v279
    %v318 = vmax.f32 %v314, %v284
    %v319 = vmax.f32 %v315, %v287
    %v320 = vmax.f32 %v316, %v292
    %v321 = vmax.f32 %v317, %v295
    %v322 = vmax.f32 %v318, %v300
    %v323 = vmax.f32 %v319, %v303
    %v324 = vmax.f32 %v320, %v308
    %v325 = vmax.f32 %v321, %v311
    %v326 = vmax.f32 %v322, %v323
    %v327 = vmax.f32 %v324, %v325
    %v328 = vmax.f32 %v326, %v327
    %v329 = vrot.slane %v328, 4
    %v330 = vmax.f32 %v328, %v329
    %v331 = vrot.slane %v330, 2
    %v332 = vmax.f32 %v330, %v331
    %v333 = vrot.slane %v332, 1
    %v334 = vmax.f32 %v332, %v333
    %v335 = vsub.f32 %v252, %v334
    %v336 = vsub.f32 %v255, %v334
    %v337 = vsub.f32 %v260, %v334
    %v338 = vsub.f32 %v263, %v334
    %v339 = vsub.f32 %v268, %v334
    %v340 = vsub.f32 %v271, %v334
    %v341 = vsub.f32 %v276, %v334
    %v342 = vsub.f32 %v279, %v334
    %v343 = vsub.f32 %v284, %v334
    %v344 = vsub.f32 %v287, %v334
    %v345 = vsub.f32 %v292, %v334
    %v346 = vsub.f32 %v295, %v334
    %v347 = vsub.f32 %v300, %v334
    %v348 = vsub.f32 %v303, %v334
    %v349 = vsub.f32 %v308, %v334
    %v350 = vsub.f32 %v311, %v334
    %v351 = vmul.f32 %v335, 1.442695
    %v352 = vpow.pop %v351
    %v353 = vmul.f32 %v336, 1.442695
    %v354 = vpow.pop %v353
    %v355 = vmul.f32 %v337, 1.442695
    %v356 = vpow.pop %v355
    %v357 = vmul.f32 %v338, 1.442695
    %v358 = vpow.pop %v357
    %v359 = vmul.f32 %v339, 1.442695
    %v360 = vpow.pop %v359
    %v361 = vmul.f32 %v340, 1.442695
    %v362 = vpow.pop %v361
    %v363 = vmul.f32 %v341, 1.442695
    %v364 = vpow.pop %v363
    %v365 = vmul.f32 %v342, 1.442695
    %v366 = vpow.pop %v365
    %v367 = vmul.f32 %v343, 1.442695
    %v368 = vpow.pop %v367
    %v369 = vmul.f32 %v344, 1.442695
    %v370 = vpow.pop %v369
    %v371 = vmul.f32 %v345, 1.442695
    %v372 = vpow.pop %v371
    %v373 = vmul.f32 %v346, 1.442695
    %v374 = vpow.pop %v373
    %v375 = vmul.f32 %v347, 1.442695
    %v376 = vpow.pop %v375
    %v377 = vmul.f32 %v348, 1.442695
    %v378 = vpow.pop %v377
    %v379 = vmul.f32 %v349, 1.442695
    %v380 = vpow.pop %v379
    %v381 = vmul.f32 %v350, 1.442695
    %v382 = vpow.pop %v381
    %v383 = vadd.f32 %v352, %v354
    %v384 = vadd.f32 %v383, %v356
    %v385 = vadd.f32 %v384, %v358
    %v386 = vadd.f32 %v385, %v360
    %v387 = vadd.f32 %v386, %v362
    %v388 = vadd.f32 %v387, %v364
    %v389 = vadd.f32 %v388, %v366
    %v390 = vadd.f32 %v389, %v368
    %v391 = vadd.f32 %v390, %v370
    %v392 = vadd.f32 %v391, %v372
    %v393 = vadd.f32 %v392, %v374
    %v394 = vadd.f32 %v393, %v376
    %v395 = vadd.f32 %v394, %v378
    %v396 = vadd.f32 %v395, %v380
    %v397 = vadd.f32 %v396, %v382
    %v398 = vrot.slane %v397, 4
    %v399 = vadd.f32 %v397, %v398
    %v400 = vrot.slane %v399, 2
    %v401 = vadd.f32 %v399, %v400
    %v402 = vrot.slane %v401, 1
    %v403 = vadd.f32 %v401, %v402
    %v404 = vrcp.pop %v403
    %v405 = vmul.f32 %v352, %v404
    %v406 = vmul.f32 %v354, %v404
    %v407 = vmul.f32 %v356, %v404
    %v408 = vmul.f32 %v358, %v404
    %v409 = vmul.f32 %v360, %v404
    %v410 = vmul.f32 %v362, %v404
    %v411 = vmul.f32 %v364, %v404
    %v412 = vmul.f32 %v366, %v404
    %v413 = vmul.f32 %v368, %v404
    %v414 = vmul.f32 %v370, %v404
    %v415 = vmul.f32 %v372, %v404
    %v416 = vmul.f32 %v374, %v404
    %v417 = vmul.f32 %v376, %v404
    %v418 = vmul.f32 %v378, %v404
    %v419 = vmul.f32 %v380, %v404
    %v420 = vmul.f32 %v382, %v404
    %v421 = vpack.c.bf16 %v406, %v405
    %v422 = vpack.c.bf16 %v408, %v407
    %v423 = vpack.c.bf16 %v410, %v409
    %v424 = vpack.c.bf16 %v412, %v411
    %v425 = vpack.c.bf16 %v414, %v413
    %v426 = vpack.c.bf16 %v416, %v415
    %v427 = vpack.c.bf16 %v418, %v417
    %v428 = vpack.c.bf16 %v420, %v419
    %429 = vmatprep.subr.bf16.mxu0 0
    %430 = vmatpush1.bf16.msra.mxu0 %v421
    %431 = vmatprep.subr.bf16.mxu0 0
    %432 = vmatpush1.bf16.msra.mxu0 %v422
    %433 = vmatprep.subr.bf16.mxu0 0
    %434 = vmatpush1.bf16.msra.mxu0 %v423
    %435 = vmatprep.subr.bf16.mxu0 0
    %436 = vmatpush1.bf16.msra.mxu0 %v424
    %437 = vmatprep.subr.bf16.mxu0 0
    %438 = vmatpush1.bf16.msra.mxu0 %v425
    %439 = vmatprep.subr.bf16.mxu0 0
    %440 = vmatpush1.bf16.msra.mxu0 %v426
    %441 = vmatprep.subr.bf16.mxu0 0
    %442 = vmatpush1.bf16.msra.mxu0 %v427
    %443 = vmatprep.subr.bf16.mxu0 0
    %444 = vmatpush1.bf16.msra.mxu0 %v428
    %445 = vmatprep.subr.bf16.mxu0 0
    %446 = vmatpush1.bf16.msra.mxu0 0
    %447 = vmatprep.subr.bf16.mxu0 0
    %448 = vmatpush1.bf16.msra.mxu0 0
    %449 = vmatprep.subr.bf16.mxu0 0
    %450 = vmatpush1.bf16.msra.mxu0 0
    %451 = vmatprep.subr.bf16.mxu0 0
    %452 = vmatpush1.bf16.msra.mxu0 0
    %453 = vmatprep.subr.bf16.mxu0 0
    %454 = vmatpush1.bf16.msra.mxu0 0
    %455 = vmatprep.subr.bf16.mxu0 0
    %456 = vmatpush1.bf16.msra.mxu0 0
    %457 = vmatprep.subr.bf16.mxu0 0
    %458 = vmatpush1.bf16.msra.mxu0 0
    %459 = vmatprep.subr.bf16.mxu0 0
    %460 = vmatpush1.bf16.msra.mxu0 0
    %461 = vmatprep.mubr.bf16.mxu0 0
    %462 = vmatmul.mubr.bf16.gmra.mrb[0].mxu0 %v168
    %v463 = vpop.f32.mrb[0].mxu0
    %v464 = vadd.f32 0.0, %v463
    %v465 = vpop.f32.mrb[0].mxu0
    %v466 = vpop.f32.mrb[0].mxu0
    %v467 = vadd.f32 0.0, %v466
    %v468 = vpop.f32.mrb[0].mxu0
    %469 = vmatprep.mubr.bf16.mxu0 0
    %470 = vmatmul.mubr.bf16.gmra.mrb[0].mxu0 %v169
    %v471 = vpop.f32.mrb[0].mxu0
    %v472 = vadd.f32 0.0, %v471
    %v473 = vpop.f32.mrb[0].mxu0
    %v474 = vpop.f32.mrb[0].mxu0
    %v475 = vadd.f32 0.0, %v474
    %v476 = vpop.f32.mrb[0].mxu0
    %477 = vmatprep.mubr.bf16.mxu0 0
    %478 = vmatmul.mubr.bf16.gmra.mrb[0].mxu0 %v170
    %v479 = vpop.f32.mrb[0].mxu0
    %v480 = vadd.f32 0.0, %v479
    %v481 = vpop.f32.mrb[0].mxu0
    %v482 = vpop.f32.mrb[0].mxu0
    %v483 = vadd.f32 0.0, %v482
    %v484 = vpop.f32.mrb[0].mxu0
    %485 = vmatprep.mubr.bf16.mxu0 0
    %486 = vmatmul.mubr.bf16.gmra.mrb[0].mxu0 %v171
    %v487 = vpop.f32.mrb[0].mxu0
    %v488 = vadd.f32 0.0, %v487
    %v489 = vpop.f32.mrb[0].mxu0
    %v490 = vpop.f32.mrb[0].mxu0
    %v491 = vadd.f32 0.0, %v490
    %v492 = vpop.f32.mrb[0].mxu0
    %493 = vdwg.mxu0
    %v494 = vpack.c.bf16 %v467, %v464
    %v495 = vpack.c.bf16 %v475, %v472
    %v496 = vpack.c.bf16 %v483, %v480
    %v497 = vpack.c.bf16 %v491, %v488
    %498 = vmatprep.subr.bf16.mxu0 0
    %499 = vmatpush1.bf16.msra.mxu0 %v56
    %500 = vmatprep.subr.bf16.mxu0 0
    %501 = vmatpush1.bf16.msra.mxu0 %v57
    %502 = vmatprep.subr.bf16.mxu0 0
    %503 = vmatpush1.bf16.msra.mxu0 %v58
    %504 = vmatprep.subr.bf16.mxu0 0
    %505 = vmatpush1.bf16.msra.mxu0 %v59
    %506 = vmatprep.subr.bf16.mxu0 0
    %507 = vmatpush1.bf16.msra.mxu0 %v60
    %508 = vmatprep.subr.bf16.mxu0 0
    %509 = vmatpush1.bf16.msra.mxu0 %v61
    %510 = vmatprep.subr.bf16.mxu0 0
    %511 = vmatpush1.bf16.msra.mxu0 %v62
    %512 = vmatprep.subr.bf16.mxu0 0
    %513 = vmatpush1.bf16.msra.mxu0 %v63
    %514 = vmatprep.subr.bf16.mxu0 0
    %515 = vmatpush1.bf16.msra.mxu0 0
    %516 = vmatprep.subr.bf16.mxu0 0
    %517 = vmatpush1.bf16.msra.mxu0 0
    %518 = vmatprep.subr.bf16.mxu0 0
    %519 = vmatpush1.bf16.msra.mxu0 0
    %520 = vmatprep.subr.bf16.mxu0 0
    %521 = vmatpush1.bf16.msra.mxu0 0
    %522 = vmatprep.subr.bf16.mxu0 0
    %523 = vmatpush1.bf16.msra.mxu0 0
    %524 = vmatprep.subr.bf16.mxu0 0
    %525 = vmatpush1.bf16.msra.mxu0 0
    %526 = vmatprep.subr.bf16.mxu0 0
    %527 = vmatpush1.bf16.msra.mxu0 0
    %528 = vmatprep.subr.bf16.mxu0 0
    %529 = vmatpush1.bf16.msra.mxu0 0
    %530 = vmatprep.mubr.bf16.mxu0 0
    %531 = vmatmul.mubr.bf16.gmra.mrb[0].mxu0 %v494
    %v532 = vpop.f32.mrb[0].mxu0
    %v533 = vadd.f32 %v69, %v532
    %v534 = vpop.f32.mrb[0].mxu0
    %v535 = vpop.f32.mrb[0].mxu0
    %v536 = vadd.f32 %v69, %v535
    %v537 = vpop.f32.mrb[0].mxu0
    %538 = vmatprep.mubr.bf16.mxu0 0
    %539 = vmatmul.mubr.bf16.gmra.mrb[0].mxu0 %v495
    %v540 = vpop.f32.mrb[0].mxu0
    %v541 = vadd.f32 %v69, %v540
    %v542 = vpop.f32.mrb[0].mxu0
    %v543 = vpop.f32.mrb[0].mxu0
    %v544 = vadd.f32 %v69, %v543
    %v545 = vpop.f32.mrb[0].mxu0
    %546 = vmatprep.mubr.bf16.mxu0 0
    %547 = vmatmul.mubr.bf16.gmra.mrb[0].mxu0 %v496
    %v548 = vpop.f32.mrb[0].mxu0
    %v549 = vadd.f32 %v69, %v548
    %v550 = vpop.f32.mrb[0].mxu0
    %v551 = vpop.f32.mrb[0].mxu0
    %v552 = vadd.f32 %v69, %v551
    %v553 = vpop.f32.mrb[0].mxu0
    %554 = vmatprep.mubr.bf16.mxu0 0
    %555 = vmatmul.mubr.bf16.gmra.mrb[0].mxu0 %v497
    %v556 = vpop.f32.mrb[0].mxu0
    %v557 = vadd.f32 %v69, %v556
    %v558 = vpop.f32.mrb[0].mxu0
    %v559 = vpop.f32.mrb[0].mxu0
    %v560 = vadd.f32 %v69, %v559
    %v561 = vpop.f32.mrb[0].mxu0
    %562 = vdwg.mxu0
    %563 = vst [vmem:[#allocation2] sm:$0xff] %v533
    %564 = vst [vmem:[#allocation2 + $0x8] sm:$0xff] %v536
    %565 = vst [vmem:[#allocation2 + $0x10] sm:$0xff] %v541
    %566 = vst [vmem:[#allocation2 + $0x18] sm:$0xff] %v544
    %567 = vst [vmem:[#allocation2 + $0x20] sm:$0xff] %v549
    %568 = vst [vmem:[#allocation2 + $0x28] sm:$0xff] %v552
    %569 = vst [vmem:[#allocation2 + $0x30] sm:$0xff] %v557
    %570 = vst [vmem:[#allocation2 + $0x38] sm:$0xff] %v560
    %571 = vxpose.xlu0.c.b16.start [1/8] %v172, 128
    %572 = vxpose.xlu0.c.b16.cont [2/8] %v173, 128
    %573 = vxpose.xlu0.c.b16.cont [3/8] %v174, 128
    %574 = vxpose.xlu0.c.b16.cont [4/8] %v175, 128
    %575 = vxpose.xlu0.c.b16.cont [5/8] 0, 128
    %576 = vxpose.xlu0.c.b16.cont [6/8] 0, 128
    %577 = vxpose.xlu0.c.b16.cont [7/8] 0, 128
    %578 = vxpose.xlu0.c.b16.end [8/8] 0, 128
    %v579 = vpop.trf.xlu0
    %v580 = vpop.trf.xlu0
    %v581 = vpop.trf.xlu0
    %v582 = vpop.trf.xlu0
    %v583 = vpop.trf.xlu0
    %v584 = vpop.trf.xlu0
    %v585 = vpop.trf.xlu0
    %v586 = vpop.trf.xlu0
    %v588 = vsel %vm192, %v579, 0
    %v591 = vsel %vm192, %v580, 0
    %v594 = vsel %vm192, %v581, 0
    %v597 = vsel %vm192, %v582, 0
    %v600 = vsel %vm192, %v583, 0
    %v603 = vsel %vm192, %v584, 0
    %v606 = vsel %vm192, %v585, 0
    %v609 = vsel %vm192, %v586, 0
    %611 = vmatprep.subr.bf16.mxu0 0
    %612 = vmatpush1.bf16.msra.mxu0 %v172
    %613 = vmatprep.subr.bf16.mxu0 0
    %614 = vmatpush1.bf16.msra.mxu0 %v173
    %615 = vmatprep.subr.bf16.mxu0 0
    %616 = vmatpush1.bf16.msra.mxu0 %v174
    %617 = vmatprep.subr.bf16.mxu0 0
    %618 = vmatpush1.bf16.msra.mxu0 %v175
    %619 = vmatprep.subr.bf16.mxu0 0
    %620 = vmatpush1.bf16.msra.mxu0 0
    %621 = vmatprep.subr.bf16.mxu0 0
    %622 = vmatpush1.bf16.msra.mxu0 0
    %623 = vmatprep.subr.bf16.mxu0 0
    %624 = vmatpush1.bf16.msra.mxu0 0
    %625 = vmatprep.subr.bf16.mxu0 0
    %626 = vmatpush1.bf16.msra.mxu0 0
    %627 = vmatprep.subr.bf16.mxu0 0
    %628 = vmatpush1.bf16.msra.mxu0 0
    %629 = vmatprep.subr.bf16.mxu0 0
    %630 = vmatpush1.bf16.msra.mxu0 0
    %631 = vmatprep.subr.bf16.mxu0 0
    %632 = vmatpush1.bf16.msra.mxu0 0
    %633 = vmatprep.subr.bf16.mxu0 0
    %634 = vmatpush1.bf16.msra.mxu0 0
    %635 = vmatprep.subr.bf16.mxu0 0
    %636 = vmatpush1.bf16.msra.mxu0 0
    %637 = vmatprep.subr.bf16.mxu0 0
    %638 = vmatpush1.bf16.msra.mxu0 0
    %639 = vmatprep.subr.bf16.mxu0 0
    %640 = vmatpush1.bf16.msra.mxu0 0
    %641 = vmatprep.subr.bf16.mxu0 0
    %642 = vmatpush1.bf16.msra.mxu0 0
    %643 = vmatprep.mubr.bf16.mxu0 0
    %644 = vmatmul.mubr.bf16.gmra.mrb[0].mxu0 %v588
    %v645 = vpop.f32.mrb[0].mxu0
    %v646 = vadd.f32 0.0, %v645
    %v647 = vpop.f32.mrb[0].mxu0
    %v648 = vpop.f32.mrb[0].mxu0
    %v649 = vadd.f32 0.0, %v648
    %v650 = vpop.f32.mrb[0].mxu0
    %651 = vmatprep.mubr.bf16.mxu0 0
    %652 = vmatmul.mubr.bf16.gmra.mrb[0].mxu0 %v591
    %v653 = vpop.f32.mrb[0].mxu0
    %v654 = vadd.f32 0.0, %v653
    %v655 = vpop.f32.mrb[0].mxu0
    %v656 = vpop.f32.mrb[0].mxu0
    %v657 = vadd.f32 0.0, %v656
    %v658 = vpop.f32.mrb[0].mxu0
    %659 = vmatprep.mubr.bf16.mxu0 0
    %660 = vmatmul.mubr.bf16.gmra.mrb[0].mxu0 %v594
    %v661 = vpop.f32.mrb[0].mxu0
    %v662 = vadd.f32 0.0, %v661
    %v663 = vpop.f32.mrb[0].mxu0
    %v664 = vpop.f32.mrb[0].mxu0
    %v665 = vadd.f32 0.0, %v664
    %v666 = vpop.f32.mrb[0].mxu0
    %667 = vmatprep.mubr.bf16.mxu0 0
    %668 = vmatmul.mubr.bf16.gmra.mrb[0].mxu0 %v597
    %v669 = vpop.f32.mrb[0].mxu0
    %v670 = vadd.f32 0.0, %v669
    %v671 = vpop.f32.mrb[0].mxu0
    %v672 = vpop.f32.mrb[0].mxu0
    %v673 = vadd.f32 0.0, %v672
    %v674 = vpop.f32.mrb[0].mxu0
    %675 = vmatprep.mubr.bf16.mxu0 0
    %676 = vmatmul.mubr.bf16.gmra.mrb[0].mxu0 %v600
    %v677 = vpop.f32.mrb[0].mxu0
    %v678 = vadd.f32 0.0, %v677
    %v679 = vpop.f32.mrb[0].mxu0
    %v680 = vpop.f32.mrb[0].mxu0
    %v681 = vadd.f32 0.0, %v680
    %v682 = vpop.f32.mrb[0].mxu0
    %683 = vmatprep.mubr.bf16.mxu0 0
    %684 = vmatmul.mubr.bf16.gmra.mrb[0].mxu0 %v603
    %v685 = vpop.f32.mrb[0].mxu0
    %v686 = vadd.f32 0.0, %v685
    %v687 = vpop.f32.mrb[0].mxu0
    %v688 = vpop.f32.mrb[0].mxu0
    %v689 = vadd.f32 0.0, %v688
    %v690 = vpop.f32.mrb[0].mxu0
    %691 = vmatprep.mubr.bf16.mxu0 0
    %692 = vmatmul.mubr.bf16.gmra.mrb[0].mxu0 %v606
    %v693 = vpop.f32.mrb[0].mxu0
    %v694 = vadd.f32 0.0, %v693
    %v695 = vpop.f32.mrb[0].mxu0
    %v696 = vpop.f32.mrb[0].mxu0
    %v697 = vadd.f32 0.0, %v696
    %v698 = vpop.f32.mrb[0].mxu0
    %699 = vmatprep.mubr.bf16.mxu0 0
    %700 = vmatmul.mubr.bf16.gmra.mrb[0].mxu0 %v609
    %v701 = vpop.f32.mrb[0].mxu0
    %v702 = vadd.f32 0.0, %v701
    %v703 = vpop.f32.mrb[0].mxu0
    %v704 = vpop.f32.mrb[0].mxu0
    %v705 = vadd.f32 0.0, %v704
    %v706 = vpop.f32.mrb[0].mxu0
    %707 = vdwg.mxu0
    %v708 = vmax.f32 %v646, %v662
    %v709 = vmax.f32 %v649, %v665
    %v710 = vmax.f32 %v654, %v670
    %v711 = vmax.f32 %v657, %v673
    %v712 = vmax.f32 %v708, %v678
    %v713 = vmax.f32 %v709, %v681
    %v714 = vmax.f32 %v710, %v686
    %v715 = vmax.f32 %v711, %v689
    %v716 = vmax.f32 %v712, %v694
    %v717 = vmax.f32 %v713, %v697
    %v718 = vmax.f32 %v714, %v702
    %v719 = vmax.f32 %v715, %v705
    %v720 = vmax.f32 %v716, %v717
    %v721 = vmax.f32 %v718, %v719
    %v722 = vmax.f32 %v720, %v721
    %v723 = vrot.slane %v722, 4
    %v724 = vmax.f32 %v722, %v723
    %v725 = vrot.slane %v724, 2
    %v726 = vmax.f32 %v724, %v725
    %v727 = vrot.slane %v726, 1
    %v728 = vmax.f32 %v726, %v727
    %v729 = vsub.f32 %v646, %v728
    %v730 = vsub.f32 %v649, %v728
    %v731 = vsub.f32 %v654, %v728
    %v732 = vsub.f32 %v657, %v728
    %v733 = vsub.f32 %v662, %v728
    %v734 = vsub.f32 %v665, %v728
    %v735 = vsub.f32 %v670, %v728
    %v736 = vsub.f32 %v673, %v728
    %v737 = vsub.f32 %v678, %v728
    %v738 = vsub.f32 %v681, %v728
    %v739 = vsub.f32 %v686, %v728
    %v740 = vsub.f32 %v689, %v728
    %v741 = vsub.f32 %v694, %v728
    %v742 = vsub.f32 %v697, %v728
    %v743 = vsub.f32 %v702, %v728
    %v744 = vsub.f32 %v705, %v728
    %v745 = vmul.f32 %v729, 1.442695
    %v746 = vpow.pop %v745
    %v747 = vmul.f32 %v730, 1.442695
    %v748 = vpow.pop %v747
    %v749 = vmul.f32 %v731, 1.442695
    %v750 = vpow.pop %v749
    %v751 = vmul.f32 %v732, 1.442695
    %v752 = vpow.pop %v751
    %v753 = vmul.f32 %v733, 1.442695
    %v754 = vpow.pop %v753
    %v755 = vmul.f32 %v734, 1.442695
    %v756 = vpow.pop %v755
    %v757 = vmul.f32 %v735, 1.442695
    %v758 = vpow.pop %v757
    %v759 = vmul.f32 %v736, 1.442695
    %v760 = vpow.pop %v759
    %v761 = vmul.f32 %v737, 1.442695
    %v762 = vpow.pop %v761
    %v763 = vmul.f32 %v738, 1.442695
    %v764 = vpow.pop %v763
    %v765 = vmul.f32 %v739, 1.442695
    %v766 = vpow.pop %v765
    %v767 = vmul.f32 %v740, 1.442695
    %v768 = vpow.pop %v767
    %v769 = vmul.f32 %v741, 1.442695
    %v770 = vpow.pop %v769
    %v771 = vmul.f32 %v742, 1.442695
    %v772 = vpow.pop %v771
    %v773 = vmul.f32 %v743, 1.442695
    %v774 = vpow.pop %v773
    %v775 = vmul.f32 %v744, 1.442695
    %v776 = vpow.pop %v775
    %v777 = vadd.f32 %v746, %v748
    %v778 = vadd.f32 %v777, %v750
    %v779 = vadd.f32 %v778, %v752
    %v780 = vadd.f32 %v779, %v754
    %v781 = vadd.f32 %v780, %v756
    %v782 = vadd.f32 %v781, %v758
    %v783 = vadd.f32 %v782, %v760
    %v784 = vadd.f32 %v783, %v762
    %v785 = vadd.f32 %v784, %v764
    %v786 = vadd.f32 %v785, %v766
    %v787 = vadd.f32 %v786, %v768
    %v788 = vadd.f32 %v787, %v770
    %v789 = vadd.f32 %v788, %v772
    %v790 = vadd.f32 %v789, %v774
    %v791 = vadd.f32 %v790, %v776
    %v792 = vrot.slane %v791, 4
    %v793 = vadd.f32 %v791, %v792
    %v794 = vrot.slane %v793, 2
    %v795 = vadd.f32 %v793, %v794
    %v796 = vrot.slane %v795, 1
    %v797 = vadd.f32 %v795, %v796
    %v798 = vrcp.pop %v797
    %v799 = vmul.f32 %v746, %v798
    %v800 = vmul.f32 %v748, %v798
    %v801 = vmul.f32 %v750, %v798
    %v802 = vmul.f32 %v752, %v798
    %v803 = vmul.f32 %v754, %v798
    %v804 = vmul.f32 %v756, %v798
    %v805 = vmul.f32 %v758, %v798
    %v806 = vmul.f32 %v760, %v798
    %v807 = vmul.f32 %v762, %v798
    %v808 = vmul.f32 %v764, %v798
    %v809 = vmul.f32 %v766, %v798
    %v810 = vmul.f32 %v768, %v798
    %v811 = vmul.f32 %v770, %v798
    %v812 = vmul.f32 %v772, %v798
    %v813 = vmul.f32 %v774, %v798
    %v814 = vmul.f32 %v776, %v798
    %v815 = vpack.c.bf16 %v800, %v799
    %v816 = vpack.c.bf16 %v802, %v801
    %v817 = vpack.c.bf16 %v804, %v803
    %v818 = vpack.c.bf16 %v806, %v805
    %v819 = vpack.c.bf16 %v808, %v807
    %v820 = vpack.c.bf16 %v810, %v809
    %v821 = vpack.c.bf16 %v812, %v811
    %v822 = vpack.c.bf16 %v814, %v813
    %823 = vmatprep.subr.bf16.mxu0 0
    %824 = vmatpush1.bf16.msra.mxu0 %v815
    %825 = vmatprep.subr.bf16.mxu0 0
    %826 = vmatpush1.bf16.msra.mxu0 %v816
    %827 = vmatprep.subr.bf16.mxu0 0
    %828 = vmatpush1.bf16.msra.mxu0 %v817
    %829 = vmatprep.subr.bf16.mxu0 0
    %830 = vmatpush1.bf16.msra.mxu0 %v818
    %831 = vmatprep.subr.bf16.mxu0 0
    %832 = vmatpush1.bf16.msra.mxu0 %v819
    %833 = vmatprep.subr.bf16.mxu0 0
    %834 = vmatpush1.bf16.msra.mxu0 %v820
    %835 = vmatprep.subr.bf16.mxu0 0
    %836 = vmatpush1.bf16.msra.mxu0 %v821
    %837 = vmatprep.subr.bf16.mxu0 0
    %838 = vmatpush1.bf16.msra.mxu0 %v822
    %839 = vmatprep.subr.bf16.mxu0 0
    %840 = vmatpush1.bf16.msra.mxu0 0
    %841 = vmatprep.subr.bf16.mxu0 0
    %842 = vmatpush1.bf16.msra.mxu0 0
    %843 = vmatprep.subr.bf16.mxu0 0
    %844 = vmatpush1.bf16.msra.mxu0 0
    %845 = vmatprep.subr.bf16.mxu0 0
    %846 = vmatpush1.bf16.msra.mxu0 0
    %847 = vmatprep.subr.bf16.mxu0 0
    %848 = vmatpush1.bf16.msra.mxu0 0
    %849 = vmatprep.subr.bf16.mxu0 0
    %850 = vmatpush1.bf16.msra.mxu0 0
    %851 = vmatprep.subr.bf16.mxu0 0
    %852 = vmatpush1.bf16.msra.mxu0 0
    %853 = vmatprep.subr.bf16.mxu0 0
    %854 = vmatpush1.bf16.msra.mxu0 0
    %855 = vmatprep.mubr.bf16.mxu0 0
    %856 = vmatmul.mubr.bf16.gmra.mrb[0].mxu0 %v172
    %v857 = vpop.f32.mrb[0].mxu0
    %v858 = vadd.f32 0.0, %v857
    %v859 = vpop.f32.mrb[0].mxu0
    %v860 = vpop.f32.mrb[0].mxu0
    %v861 = vadd.f32 0.0, %v860
    %v862 = vpop.f32.mrb[0].mxu0
    %863 = vmatprep.mubr.bf16.mxu0 0
    %864 = vmatmul.mubr.bf16.gmra.mrb[0].mxu0 %v173
    %v865 = vpop.f32.mrb[0].mxu0
    %v866 = vadd.f32 0.0, %v865
    %v867 = vpop.f32.mrb[0].mxu0
    %v868 = vpop.f32.mrb[0].mxu0
    %v869 = vadd.f32 0.0, %v868
    %v870 = vpop.f32.mrb[0].mxu0
    %871 = vmatprep.mubr.bf16.mxu0 0
    %872 = vmatmul.mubr.bf16.gmra.mrb[0].mxu0 %v174
    %v873 = vpop.f32.mrb[0].mxu0
    %v874 = vadd.f32 0.0, %v873
    %v875 = vpop.f32.mrb[0].mxu0
    %v876 = vpop.f32.mrb[0].mxu0
    %v877 = vadd.f32 0.0, %v876
    %v878 = vpop.f32.mrb[0].mxu0
    %879 = vmatprep.mubr.bf16.mxu0 0
    %880 = vmatmul.mubr.bf16.gmra.mrb[0].mxu0 %v175
    %v881 = vpop.f32.mrb[0].mxu0
    %v882 = vadd.f32 0.0, %v881
    %v883 = vpop.f32.mrb[0].mxu0
    %v884 = vpop.f32.mrb[0].mxu0
    %v885 = vadd.f32 0.0, %v884
    %v886 = vpop.f32.mrb[0].mxu0
    %887 = vdwg.mxu0
    %v888 = vpack.c.bf16 %v861, %v858
    %v889 = vpack.c.bf16 %v869, %v866
    %v890 = vpack.c.bf16 %v877, %v874
    %v891 = vpack.c.bf16 %v885, %v882
    %892 = vmatprep.subr.bf16.mxu0 0
    %893 = vmatpush1.bf16.msra.mxu0 %v56
    %894 = vmatprep.subr.bf16.mxu0 0
    %895 = vmatpush1.bf16.msra.mxu0 %v57
    %896 = vmatprep.subr.bf16.mxu0 0
    %897 = vmatpush1.bf16.msra.mxu0 %v58
    %898 = vmatprep.subr.bf16.mxu0 0
    %899 = vmatpush1.bf16.msra.mxu0 %v59
    %900 = vmatprep.subr.bf16.mxu0 0
    %901 = vmatpush1.bf16.msra.mxu0 %v60
    %902 = vmatprep.subr.bf16.mxu0 0
    %903 = vmatpush1.bf16.msra.mxu0 %v61
    %904 = vmatprep.subr.bf16.mxu0 0
    %905 = vmatpush1.bf16.msra.mxu0 %v62
    %906 = vmatprep.subr.bf16.mxu0 0
    %907 = vmatpush1.bf16.msra.mxu0 %v63
    %908 = vmatprep.subr.bf16.mxu0 0
    %909 = vmatpush1.bf16.msra.mxu0 0
    %910 = vmatprep.subr.bf16.mxu0 0
    %911 = vmatpush1.bf16.msra.mxu0 0
    %912 = vmatprep.subr.bf16.mxu0 0
    %913 = vmatpush1.bf16.msra.mxu0 0
    %914 = vmatprep.subr.bf16.mxu0 0
    %915 = vmatpush1.bf16.msra.mxu0 0
    %916 = vmatprep.subr.bf16.mxu0 0
    %917 = vmatpush1.bf16.msra.mxu0 0
    %918 = vmatprep.subr.bf16.mxu0 0
    %919 = vmatpush1.bf16.msra.mxu0 0
    %920 = vmatprep.subr.bf16.mxu0 0
    %921 = vmatpush1.bf16.msra.mxu0 0
    %922 = vmatprep.subr.bf16.mxu0 0
    %923 = vmatpush1.bf16.msra.mxu0 0
    %924 = vmatprep.mubr.bf16.mxu0 0
    %925 = vmatmul.mubr.bf16.gmra.mrb[0].mxu0 %v888
    %v926 = vpop.f32.mrb[0].mxu0
    %v927 = vadd.f32 %v69, %v926
    %v928 = vpop.f32.mrb[0].mxu0
    %v929 = vpop.f32.mrb[0].mxu0
    %v930 = vadd.f32 %v69, %v929
    %v931 = vpop.f32.mrb[0].mxu0
    %932 = vmatprep.mubr.bf16.mxu0 0
    %933 = vmatmul.mubr.bf16.gmra.mrb[0].mxu0 %v889
    %v934 = vpop.f32.mrb[0].mxu0
    %v935 = vadd.f32 %v69, %v934
    %v936 = vpop.f32.mrb[0].mxu0
    %v937 = vpop.f32.mrb[0].mxu0
    %v938 = vadd.f32 %v69, %v937
    %v939 = vpop.f32.mrb[0].mxu0
    %940 = vmatprep.mubr.bf16.mxu0 0
    %941 = vmatmul.mubr.bf16.gmra.mrb[0].mxu0 %v890
    %v942 = vpop.f32.mrb[0].mxu0
    %v943 = vadd.f32 %v69, %v942
    %v944 = vpop.f32.mrb[0].mxu0
    %v945 = vpop.f32.mrb[0].mxu0
    %v946 = vadd.f32 %v69, %v945
    %v947 = vpop.f32.mrb[0].mxu0
    %948 = vmatprep.mubr.bf16.mxu0 0
    %949 = vmatmul.mubr.bf16.gmra.mrb[0].mxu0 %v891
    %v950 = vpop.f32.mrb[0].mxu0
    %v951 = vadd.f32 %v69, %v950
    %v952 = vpop.f32.mrb[0].mxu0
    %v953 = vpop.f32.mrb[0].mxu0
    %v954 = vadd.f32 %v69, %v953
    %v955 = vpop.f32.mrb[0].mxu0
    %956 = vdwg.mxu0
    %957 = vst [vmem:[#allocation2 + $0x40] sm:$0xff] %v927
    %958 = vst [vmem:[#allocation2 + $0x48] sm:$0xff] %v930
    %959 = vst [vmem:[#allocation2 + $0x50] sm:$0xff] %v935
    %960 = vst [vmem:[#allocation2 + $0x58] sm:$0xff] %v938
    %961 = vst [vmem:[#allocation2 + $0x60] sm:$0xff] %v943
    %962 = vst [vmem:[#allocation2 + $0x68] sm:$0xff] %v946
    %963 = vst [vmem:[#allocation2 + $0x70] sm:$0xff] %v951
    %964 = vst [vmem:[#allocation2 + $0x78] sm:$0xff] %v954
    // Predicated region
    $region14: #{_ssa_pallas_impl.1} parent=1 // pred_check
      _
    $region15: #{_ssa_pallas_impl.1} parent=1 // pred_check_branch
      %966 = sbr.rel (0) target = $region17
    $region16: #{_ssa_pallas_impl.1} parent=1 // pred_region
      %s968 = ssub.s32 2048, 2048
      %969 = vsyncadd [#allocation3], %s968
      %s970 = sshll.u32 [#allocation2], 4
      %s971 = int_to_ptr.vmem [resolvable:$true] %s970
      %976 = dma.vmem_to_hbm [thread:$0]  %s971, 2048, %s3, [#allocation3], 128, 128, 8
    $region17: #{_ssa_pallas_impl.1} parent=1 // pred_fallthru
      _
    // Predicated region
    $region18: #{_ssa_pallas_impl.1} parent=1 // pred_check
      _
    $region19: #{_ssa_pallas_impl.1} parent=1 // pred_check_branch
      %978 = sbr.rel (0) target = $region21
    $region20: #{_ssa_pallas_impl.1} parent=1 // pred_region
      %979 = dma.done [#allocation3], 2048
    $region21: #{_ssa_pallas_impl.1} parent=1 // pred_fallthru
      _
    %980 = vsyncpa [#allocation3], 1

</llo_original>
